<compile_context>
chip_gen: v5e
topology: v5e:2x2
jax: 0.10.0
libtpu: 0.0.40
codegen_flags: <defaults>
</compile_context>

<pallas_src>
import jax
import jax.numpy as jnp
from jax.experimental import pallas as pl
from jax.experimental.pallas import tpu as pltpu

_LANE = 128
_MAX_TILE_B = 8192  # lanes per batch tile; bounds VMEM/vreg pressure on all gens


def _round_up(n, m):
    return ((n + m - 1) // m) * m


def _tensorcores_per_chip() -> int:
    """TensorCores a single Pallas kernel can shard a 'parallel' axis across.
    Dual-TC chips (v7x, v4/v5p megacore) -> 2; v5e/v6e (and unknown) -> 1."""
    try:
        kind = jax.devices()[0].device_kind.lower().replace(" ", "")
    except Exception:
        return 1
    if any(tag in kind for tag in ("v7", "7x", "v4", "v5p")):
        return 2
    return 1


def _elu(x, alpha=0.2):
    # Matches nn.ELU(alpha=0.2): x if x > 0 else alpha*(exp(x)-1).
    # min() guards exp overflow in the unselected branch.
    return jnp.where(x > 0, x, alpha * (jnp.exp(jnp.minimum(x, 0.0)) - 1.0))


def generator8g_kernel(x_ref, w1_ref, b1_ref, w2_ref, b2_ref, w3_ref, b3_ref,
                       o_ref):
    cdt = w1_ref.dtype  # MXU operand dtype (bf16 or f32); accum/bias/ELU stay f32

    # (tile_b, z_dim) -> (z_dim, tile_b): put the batch on the 128-lane axis.
    xT = x_ref[...].T.astype(cdt)

    h1 = jnp.dot(w1_ref[...], xT, preferred_element_type=jnp.float32) + b1_ref[...]
    h1 = _elu(h1, 0.2)

    h2 = jnp.dot(w2_ref[...], h1.astype(cdt),
                 preferred_element_type=jnp.float32) + b2_ref[...]
    h2 = _elu(h2, 0.2)

    outT = jnp.dot(w3_ref[...], h2.astype(cdt),
                   preferred_element_type=jnp.float32) + b3_ref[...]

    # (data_dim, tile_b) -> (tile_b, data_dim): back to batch-major for the caller.
    o_ref[...] = outT.T.astype(o_ref.dtype)


def prepare_params(params, compute_dtype=jnp.bfloat16):
    """One-time cast of the MXU operands (hoisted out of the per-call path).
    Weights keep PyTorch (out_features, in_features) layout; biases stay f32,
    shaped (out_features, 1) so they broadcast over the lane (batch) axis."""
    return {
        "w1": params["w1"].astype(compute_dtype),
        "w2": params["w2"].astype(compute_dtype),
        "w3": params["w3"].astype(compute_dtype),
        "b1": params["b1"].reshape(-1, 1).astype(jnp.float32),
        "b2": params["b2"].reshape(-1, 1).astype(jnp.float32),
        "b3": params["b3"].reshape(-1, 1).astype(jnp.float32),
    }


def generator8g_forward(x, prep):
    """x: (B, z_dim).  prep: output of prepare_params().  Returns (B, data_dim)."""
    B, z_dim = x.shape
    hidden = prep["w1"].shape[0]
    data_dim = prep["w3"].shape[0]

    # One tile per TensorCore when every tile keeps >= 128 lanes; otherwise a
    # single tile (no serial grid overhead on single-TC chips).  Cap tile_b so
    # huge batches grow the (parallel) grid instead of VMEM.
    n_cores = _tensorcores_per_chip()
    per_core = -(-B // n_cores) if B >= _LANE * n_cores else B
    tile_b = min(_round_up(max(per_core, 1), _LANE), _MAX_TILE_B)
    b_pad = _round_up(B, tile_b)
    num_tiles = b_pad // tile_b

    x_in = x if b_pad == B else jnp.pad(x, ((0, b_pad - B), (0, 0)))

    const = lambda shape: pl.BlockSpec(shape, lambda i: (0, 0))

    flops = 2 * b_pad * (z_dim * hidden + hidden * hidden + hidden * data_dim)
    transcendentals = 2 * b_pad * hidden  # exp in the two ELUs
    param_bytes = sum(int(prep[k].size) * prep[k].dtype.itemsize for k in prep)
    bytes_accessed = int(x_in.size * x_in.dtype.itemsize
                         + b_pad * data_dim * x.dtype.itemsize + param_bytes)

    out = pl.pallas_call(
        generator8g_kernel,
        out_shape=jax.ShapeDtypeStruct((b_pad, data_dim), x.dtype),
        grid_spec=pltpu.PrefetchScalarGridSpec(
            num_scalar_prefetch=0,
            grid=(num_tiles,),
            in_specs=[
                pl.BlockSpec((tile_b, z_dim), lambda i: (i, 0)),   # x batch tile
                const((hidden, z_dim)),     # w1 (VMEM-resident across steps)
                const((hidden, 1)),         # b1
                const((hidden, hidden)),    # w2
                const((hidden, 1)),         # b2
                const((data_dim, hidden)),  # w3
                const((data_dim, 1)),       # b3
            ],
            out_specs=pl.BlockSpec((tile_b, data_dim), lambda i: (i, 0)),
        ),
        compiler_params=pltpu.CompilerParams(
            dimension_semantics=("parallel",)),
        cost_estimate=pl.CostEstimate(
            flops=flops,
            transcendentals=transcendentals,
            bytes_accessed=bytes_accessed),
    )(x_in, prep["w1"], prep["b1"], prep["w2"], prep["b2"],
      prep["w3"], prep["b3"])

    return out if b_pad == B else out[:B]


def init_params(key, z_dim, hidden_size, data_dim):
    """nn.Linear-style init, PyTorch layout: W (out, in), b (out,)."""
    ks = jax.random.split(key, 6)

    def linear(kw, kb, fan_in, fan_out):
        bound = 1.0 / (fan_in ** 0.5)
        w = jax.random.uniform(kw, (fan_out, fan_in), jnp.float32, -bound, bound)
        b = jax.random.uniform(kb, (fan_out,), jnp.float32, -bound, bound)
        return w, b

    w1, b1 = linear(ks[0], ks[1], z_dim, hidden_size)
    w2, b2 = linear(ks[2], ks[3], hidden_size, hidden_size)
    w3, b3 = linear(ks[4], ks[5], hidden_size, data_dim)
    return {"w1": w1, "b1": b1, "w2": w2, "b2": b2, "w3": w3, "b3": b3}


def reference_forward(x, p):
    mm = lambda a, b: jnp.dot(a, b, precision=jax.lax.Precision.HIGHEST)
    h1 = _elu(mm(x, p["w1"].T) + p["b1"], 0.2)
    h2 = _elu(mm(h1, p["w2"].T) + p["b2"], 0.2)
    return mm(h2, p["w3"].T) + p["b3"]


if __name__ == "__main__":
    z_dim, hidden_size, data_dim = 8, 32, 2
    batch = 256

    key = jax.random.PRNGKey(0)
    k_params, k_x = jax.random.split(key)
    params = init_params(k_params, z_dim, hidden_size, data_dim)
    x = jax.random.normal(k_x, (batch, z_dim), dtype=jnp.float32)

    # f32 MXU-operand path: tight check against the pure-JAX reference.
    prep_f32 = prepare_params(params, compute_dtype=jnp.float32)
    out_f32 = jax.block_until_ready(generator8g_forward(x, prep_f32))
    ref = reference_forward(x, params)
    assert out_f32.shape == (batch, data_dim)
    assert jnp.allclose(out_f32, ref, atol=1e-4, rtol=1e-4), "f32 mismatch vs reference"

    # Default bf16 MXU-operand path (f32 accumulation / bias / ELU): compare
    # against a reference with bf16-rounded x / weights so only activation
    # rounding differs.
    prep_bf16 = prepare_params(params)  # bf16 is the default
    out_bf16 = jax.block_until_ready(generator8g_forward(x, prep_bf16))
    _rq = lambda a: a.astype(jnp.bfloat16).astype(jnp.float32)
    params_q = {**params, **{k: _rq(params[k]) for k in ("w1", "w2", "w3")}}
    ref_bf16 = reference_forward(_rq(x), params_q)
    assert jnp.allclose(out_bf16, ref_bf16, atol=2e-2, rtol=2e-2), \
        "bf16 mismatch vs bf16-rounded reference"

    # Non-128-multiple batch exercises the pad-to-128 + slice path.
    x_odd = jax.random.normal(jax.random.PRNGKey(1), (37, z_dim), dtype=jnp.float32)
    out_odd = jax.block_until_ready(generator8g_forward(x_odd, prep_f32))
    ref_odd = reference_forward(x_odd, params)
    assert out_odd.shape == (37, data_dim)
    assert jnp.allclose(out_odd, ref_odd, atol=1e-4, rtol=1e-4), "odd-batch mismatch"

    print("KERNEL_OK")
</pallas_src>

<mosaic_0001>
module attributes {stable_mosaic.version = 11 : i64} {
  func.func @generator8g_kernel(%arg0: i32, %arg1: memref<256x8xf32, #tpu.memory_space<vmem>>, %arg2: memref<32x8xf32, #tpu.memory_space<vmem>>, %arg3: memref<32x1xf32, #tpu.memory_space<vmem>>, %arg4: memref<32x32xf32, #tpu.memory_space<vmem>>, %arg5: memref<32x1xf32, #tpu.memory_space<vmem>>, %arg6: memref<2x32xf32, #tpu.memory_space<vmem>>, %arg7: memref<2x1xf32, #tpu.memory_space<vmem>>, %arg8: memref<256x2xf32, #tpu.memory_space<vmem>>) attributes {dimension_semantics = [#tpu.dimension_semantics<parallel>], iteration_bounds = array<i64: 1>, scalar_prefetch = 0 : i64, scratch_operands = 0 : i64, tpu.core_type = #tpu.core_type<tc>, window_params = [{transform_indices = @transform_0, window_bounds = array<i64: 256, 8>}, {pipeline_mode = #tpu.pipeline_mode<synchronous>, transform_indices = @transform_1, window_bounds = array<i64: 32, 8>}, {pipeline_mode = #tpu.pipeline_mode<synchronous>, transform_indices = @transform_2, window_bounds = array<i64: 32, 1>}, {pipeline_mode = #tpu.pipeline_mode<synchronous>, transform_indices = @transform_3, window_bounds = array<i64: 32, 32>}, {pipeline_mode = #tpu.pipeline_mode<synchronous>, transform_indices = @transform_4, window_bounds = array<i64: 32, 1>}, {pipeline_mode = #tpu.pipeline_mode<synchronous>, transform_indices = @transform_5, window_bounds = array<i64: 2, 32>}, {pipeline_mode = #tpu.pipeline_mode<synchronous>, transform_indices = @transform_6, window_bounds = array<i64: 2, 1>}, {transform_indices = @transform_7, window_bounds = array<i64: 256, 2>}]} {
    %c0 = arith.constant 0 : index
    %c0_0 = arith.constant 0 : index
    %0 = vector.load %arg1[%c0, %c0_0] : memref<256x8xf32, #tpu.memory_space<vmem>>, vector<256x8xf32>
    %1 = tpu.transpose %0, [1, 0] : vector<256x8xf32> -> vector<8x256xf32>
    %c0_1 = arith.constant 0 : index
    %c0_2 = arith.constant 0 : index
    %2 = vector.load %arg2[%c0_1, %c0_2] : memref<32x8xf32, #tpu.memory_space<vmem>>, vector<32x8xf32>
    %cst = arith.constant dense<0.000000e+00> : vector<32x256xf32>
    %3 = tpu.matmul %2, %1, %cst {dimension_numbers = #tpu.dot_dimension_numbers<[1], [0], [0], [1], [0, 0, 1, 1], [], []>} : vector<32x8xf32>, vector<8x256xf32>, vector<32x256xf32> -> vector<32x256xf32>
    %c0_3 = arith.constant 0 : index
    %c0_4 = arith.constant 0 : index
    %4 = vector.load %arg3[%c0_3, %c0_4] : memref<32x1xf32, #tpu.memory_space<vmem>>, vector<32x1xf32>
    %5 = vector.broadcast %4 : vector<32x1xf32> to vector<32x256xf32>
    %6 = arith.addf %3, %5 : vector<32x256xf32>
    %cst_5 = arith.constant 0.000000e+00 : f32
    %7 = vector.broadcast %cst_5 : f32 to vector<32x256xf32>
    %8 = arith.cmpf ogt, %6, %7 : vector<32x256xf32>
    %cst_6 = arith.constant 0.000000e+00 : f32
    %9 = vector.broadcast %cst_6 : f32 to vector<32x256xf32>
    %10 = arith.minimumf %6, %9 : vector<32x256xf32>
    %11 = math.exp %10 : vector<32x256xf32>
    %cst_7 = arith.constant 1.000000e+00 : f32
    %12 = vector.broadcast %cst_7 : f32 to vector<32x256xf32>
    %13 = arith.subf %11, %12 : vector<32x256xf32>
    %cst_8 = arith.constant 2.000000e-01 : f32
    %14 = vector.broadcast %cst_8 : f32 to vector<32x256xf32>
    %15 = arith.mulf %14, %13 : vector<32x256xf32>
    %16 = arith.select %8, %6, %15 : vector<32x256xi1>, vector<32x256xf32>
    %c0_9 = arith.constant 0 : index
    %c0_10 = arith.constant 0 : index
    %17 = vector.load %arg4[%c0_9, %c0_10] : memref<32x32xf32, #tpu.memory_space<vmem>>, vector<32x32xf32>
    %cst_11 = arith.constant dense<0.000000e+00> : vector<32x256xf32>
    %18 = tpu.matmul %17, %16, %cst_11 {dimension_numbers = #tpu.dot_dimension_numbers<[1], [0], [0], [1], [0, 0, 1, 1], [], []>} : vector<32x32xf32>, vector<32x256xf32>, vector<32x256xf32> -> vector<32x256xf32>
    %c0_12 = arith.constant 0 : index
    %c0_13 = arith.constant 0 : index
    %19 = vector.load %arg5[%c0_12, %c0_13] : memref<32x1xf32, #tpu.memory_space<vmem>>, vector<32x1xf32>
    %20 = vector.broadcast %19 : vector<32x1xf32> to vector<32x256xf32>
    %21 = arith.addf %18, %20 : vector<32x256xf32>
    %cst_14 = arith.constant 0.000000e+00 : f32
    %22 = vector.broadcast %cst_14 : f32 to vector<32x256xf32>
    %23 = arith.cmpf ogt, %21, %22 : vector<32x256xf32>
    %cst_15 = arith.constant 0.000000e+00 : f32
    %24 = vector.broadcast %cst_15 : f32 to vector<32x256xf32>
    %25 = arith.minimumf %21, %24 : vector<32x256xf32>
    %26 = math.exp %25 : vector<32x256xf32>
    %cst_16 = arith.constant 1.000000e+00 : f32
    %27 = vector.broadcast %cst_16 : f32 to vector<32x256xf32>
    %28 = arith.subf %26, %27 : vector<32x256xf32>
    %cst_17 = arith.constant 2.000000e-01 : f32
    %29 = vector.broadcast %cst_17 : f32 to vector<32x256xf32>
    %30 = arith.mulf %29, %28 : vector<32x256xf32>
    %31 = arith.select %23, %21, %30 : vector<32x256xi1>, vector<32x256xf32>
    %c0_18 = arith.constant 0 : index
    %c0_19 = arith.constant 0 : index
    %32 = vector.load %arg6[%c0_18, %c0_19] : memref<2x32xf32, #tpu.memory_space<vmem>>, vector<2x32xf32>
    %cst_20 = arith.constant dense<0.000000e+00> : vector<2x256xf32>
    %33 = tpu.matmul %32, %31, %cst_20 {dimension_numbers = #tpu.dot_dimension_numbers<[1], [0], [0], [1], [0, 0, 1, 1], [], []>} : vector<2x32xf32>, vector<32x256xf32>, vector<2x256xf32> -> vector<2x256xf32>
    %c0_21 = arith.constant 0 : index
    %c0_22 = arith.constant 0 : index
    %34 = vector.load %arg7[%c0_21, %c0_22] : memref<2x1xf32, #tpu.memory_space<vmem>>, vector<2x1xf32>
    %35 = vector.broadcast %34 : vector<2x1xf32> to vector<2x256xf32>
    %36 = arith.addf %33, %35 : vector<2x256xf32>
    %37 = tpu.transpose %36, [1, 0] : vector<2x256xf32> -> vector<256x2xf32>
    %c0_23 = arith.constant 0 : index
    %c0_24 = arith.constant 0 : index
    %38 = vector.load %arg8[%c0_23, %c0_24] : memref<256x2xf32, #tpu.memory_space<vmem>>, vector<256x2xf32>
    tpu.vector_store %arg8[%c0_23, %c0_24], %37 {strides = array<i32>} : memref<256x2xf32, #tpu.memory_space<vmem>>, vector<256x2xf32>,
    return
  }
  func.func @transform_0(%arg0: i32) -> (i32, i32) {
    %c0_i32 = arith.constant 0 : i32
    %c0_i32_0 = arith.constant 0 : i32
    return %arg0, %c0_i32 : i32, i32
  }
  func.func @transform_1(%arg0: i32) -> (i32, i32) {
    %c0_i32 = arith.constant 0 : i32
    %c0_i32_0 = arith.constant 0 : i32
    %c0_i32_1 = arith.constant 0 : i32
    return %c0_i32, %c0_i32_0 : i32, i32
  }
  func.func @transform_2(%arg0: i32) -> (i32, i32) {
    %c0_i32 = arith.constant 0 : i32
    %c0_i32_0 = arith.constant 0 : i32
    %c0_i32_1 = arith.constant 0 : i32
    return %c0_i32, %c0_i32_0 : i32, i32
  }
  func.func @transform_3(%arg0: i32) -> (i32, i32) {
    %c0_i32 = arith.constant 0 : i32
    %c0_i32_0 = arith.constant 0 : i32
    %c0_i32_1 = arith.constant 0 : i32
    return %c0_i32, %c0_i32_0 : i32, i32
  }
  func.func @transform_4(%arg0: i32) -> (i32, i32) {
    %c0_i32 = arith.constant 0 : i32
    %c0_i32_0 = arith.constant 0 : i32
    %c0_i32_1 = arith.constant 0 : i32
    return %c0_i32, %c0_i32_0 : i32, i32
  }
  func.func @transform_5(%arg0: i32) -> (i32, i32) {
    %c0_i32 = arith.constant 0 : i32
    %c0_i32_0 = arith.constant 0 : i32
    %c0_i32_1 = arith.constant 0 : i32
    return %c0_i32, %c0_i32_0 : i32, i32
  }
  func.func @transform_6(%arg0: i32) -> (i32, i32) {
    %c0_i32 = arith.constant 0 : i32
    %c0_i32_0 = arith.constant 0 : i32
    %c0_i32_1 = arith.constant 0 : i32
    return %c0_i32, %c0_i32_0 : i32, i32
  }
  func.func @transform_7(%arg0: i32) -> (i32, i32) {
    %c0_i32 = arith.constant 0 : i32
    %c0_i32_0 = arith.constant 0 : i32
    return %arg0, %c0_i32 : i32, i32
  }
}

</mosaic_0001>

<llo_original>
// kernel: tpu_custom_call.1
$region0: #{tpu_custom_call.1}
  #allocation0 [shape = 'u32[]', space=smem, size = 0x4, offset = 0x4, fixed_abs, tag = 'smem constant byte address 0x4 - core index']
  #allocation1 [shape = 'u32[72,128]{1,0:T(1,128)}', space=vmem, size = 0x9000, scoped, tag = 'internal scratch']
  %s0 = inlined_call_operand.vmem [shape: f32[256,8], index: 0, kind: input, shape index: {}]
  %s1 = inlined_call_operand.vmem [shape: f32[32,8], index: 1, kind: input, shape index: {}]
  %s2 = inlined_call_operand.vmem [shape: f32[32,1], index: 2, kind: input, shape index: {}]
  %s3 = inlined_call_operand.vmem [shape: f32[32,32], index: 3, kind: input, shape index: {}]
  %s4 = inlined_call_operand.vmem [shape: f32[32,1], index: 4, kind: input, shape index: {}]
  %s5 = inlined_call_operand.vmem [shape: f32[2,32], index: 5, kind: input, shape index: {}]
  %s6 = inlined_call_operand.vmem [shape: f32[2,1], index: 6, kind: input, shape index: {}]
  %s7 = inlined_call_operand.vmem [shape: f32[256,2], index: 7, kind: output, shape index: {}]
  %s8 = sld [smem:[#allocation0]]
  $region38: #{tpu_custom_call.1} parent=0
    _
  %s10 = ssub.s32 1, %s8
  %s11 = scalar_select 0, %s10, %s8
  // Predicated region
  $region2: #{tpu_custom_call.1} parent=0 // pred_check
    _
  $region3: #{tpu_custom_call.1} parent=0 // pred_check_branch
    %13 = sbr.rel (0) target = $region5
  $region4: #{tpu_custom_call.1} parent=0 // pred_region
    _
  $region5: #{tpu_custom_call.1} parent=0 // pred_fallthru
    _
  // Predicated region
  $region6: #{tpu_custom_call.1} parent=0 // pred_check
    _
  $region7: #{tpu_custom_call.1} parent=0 // pred_check_branch
    %15 = sbr.rel (0) target = $region9
  $region8: #{tpu_custom_call.1} parent=0 // pred_region
    _
  $region9: #{tpu_custom_call.1} parent=0 // pred_fallthru
    _
  // Predicated region
  $region10: #{tpu_custom_call.1} parent=0 // pred_check
    _
  $region11: #{tpu_custom_call.1} parent=0 // pred_check_branch
    %17 = sbr.rel (0) target = $region13
  $region12: #{tpu_custom_call.1} parent=0 // pred_region
    _
  $region13: #{tpu_custom_call.1} parent=0 // pred_fallthru
    _
  // Predicated region
  $region14: #{tpu_custom_call.1} parent=0 // pred_check
    _
  $region15: #{tpu_custom_call.1} parent=0 // pred_check_branch
    %19 = sbr.rel (0) target = $region17
  $region16: #{tpu_custom_call.1} parent=0 // pred_region
    _
  $region17: #{tpu_custom_call.1} parent=0 // pred_fallthru
    _
  // Predicated region
  $region18: #{tpu_custom_call.1} parent=0 // pred_check
    _
  $region19: #{tpu_custom_call.1} parent=0 // pred_check_branch
    %21 = sbr.rel (0) target = $region21
  $region20: #{tpu_custom_call.1} parent=0 // pred_region
    _
  $region21: #{tpu_custom_call.1} parent=0 // pred_fallthru
    _
  // Predicated region
  $region22: #{tpu_custom_call.1} parent=0 // pred_check
    _
  $region23: #{tpu_custom_call.1} parent=0 // pred_check_branch
    %23 = sbr.rel (0) target = $region25
  $region24: #{tpu_custom_call.1} parent=0 // pred_region
    _
  $region25: #{tpu_custom_call.1} parent=0 // pred_fallthru
    _
  // Predicated region
  $region26: #{tpu_custom_call.1} parent=0 // pred_check
    _
  $region27: #{tpu_custom_call.1} parent=0 // pred_check_branch
    %25 = sbr.rel (0) target = $region29
  $region28: #{tpu_custom_call.1} parent=0 // pred_region
    _
  $region29: #{tpu_custom_call.1} parent=0 // pred_fallthru
    _
  %v26 = vld [vmem:[%s0] sm:$0xff]
  %v27 = vld [vmem:[%s0 + $0x8] sm:$0xff]
  %v28 = vld [vmem:[%s0 + $0x10] sm:$0xff]
  %v29 = vld [vmem:[%s0 + $0x18] sm:$0xff]
  %v30 = vld [vmem:[%s0 + $0x20] sm:$0xff]
  %v31 = vld [vmem:[%s0 + $0x28] sm:$0xff]
  %v32 = vld [vmem:[%s0 + $0x30] sm:$0xff]
  %v33 = vld [vmem:[%s0 + $0x38] sm:$0xff]
  %v34 = vld [vmem:[%s0 + $0x40] sm:$0xff]
  %v35 = vld [vmem:[%s0 + $0x48] sm:$0xff]
  %v36 = vld [vmem:[%s0 + $0x50] sm:$0xff]
  %v37 = vld [vmem:[%s0 + $0x58] sm:$0xff]
  %v38 = vld [vmem:[%s0 + $0x60] sm:$0xff]
  %v39 = vld [vmem:[%s0 + $0x68] sm:$0xff]
  %v40 = vld [vmem:[%s0 + $0x70] sm:$0xff]
  %v41 = vld [vmem:[%s0 + $0x78] sm:$0xff]
  %v42 = vld [vmem:[%s0 + $0x80] sm:$0xff]
  %v43 = vld [vmem:[%s0 + $0x88] sm:$0xff]
  %v44 = vld [vmem:[%s0 + $0x90] sm:$0xff]
  %v45 = vld [vmem:[%s0 + $0x98] sm:$0xff]
  %v46 = vld [vmem:[%s0 + $0xa0] sm:$0xff]
  %v47 = vld [vmem:[%s0 + $0xa8] sm:$0xff]
  %v48 = vld [vmem:[%s0 + $0xb0] sm:$0xff]
  %v49 = vld [vmem:[%s0 + $0xb8] sm:$0xff]
  %v50 = vld [vmem:[%s0 + $0xc0] sm:$0xff]
  %v51 = vld [vmem:[%s0 + $0xc8] sm:$0xff]
  %v52 = vld [vmem:[%s0 + $0xd0] sm:$0xff]
  %v53 = vld [vmem:[%s0 + $0xd8] sm:$0xff]
  %v54 = vld [vmem:[%s0 + $0xe0] sm:$0xff]
  %v55 = vld [vmem:[%s0 + $0xe8] sm:$0xff]
  %v56 = vld [vmem:[%s0 + $0xf0] sm:$0xff]
  %v57 = vld [vmem:[%s0 + $0xf8] sm:$0xff]
  %v58 = vld [vmem:[%s1] sm:$0xff]
  %v59 = vld [vmem:[%s1 + $0x8] sm:$0xff]
  %v60 = vld [vmem:[%s1 + $0x10] sm:$0xff]
  %v61 = vld [vmem:[%s1 + $0x18] sm:$0xff]
  %v62 = vld [vmem:[%s2] sm:$0xff]
  %v63 = vld [vmem:[%s2 + $0x8] sm:$0xff]
  %v64 = vld [vmem:[%s2 + $0x10] sm:$0xff]
  %v65 = vld [vmem:[%s2 + $0x18] sm:$0xff]
  %67 = vset.pattern.permute.xlu0 0
  %68 = vperm.xlu0 %67, %v62
  %v69 = vpop.permute.xlu0 %68
  %72 = vset.pattern.permute.xlu0 0
  %73 = vperm.xlu0 %72, %v63
  %v74 = vpop.permute.xlu0 %73
  %77 = vset.pattern.permute.xlu0 0
  %78 = vperm.xlu0 %77, %v64
  %v79 = vpop.permute.xlu0 %78
  %82 = vset.pattern.permute.xlu0 0
  %83 = vperm.xlu0 %82, %v65
  %v84 = vpop.permute.xlu0 %83
  %vm86 = vcmask 64512
  %v88 = vsel %vm86, %v58, 0
  %v91 = vsel %vm86, %v59, 0
  %v94 = vsel %vm86, %v60, 0
  %v97 = vsel %vm86, %v61, 0
  %v100 = vsel %vm86, %v26, 0
  %v103 = vsel %vm86, %v27, 0
  %v106 = vsel %vm86, %v28, 0
  %v109 = vsel %vm86, %v29, 0
  %v112 = vsel %vm86, %v30, 0
  %v115 = vsel %vm86, %v31, 0
  %v118 = vsel %vm86, %v32, 0
  %v121 = vsel %vm86, %v33, 0
  %v124 = vsel %vm86, %v34, 0
  %v127 = vsel %vm86, %v35, 0
  %v130 = vsel %vm86, %v36, 0
  %v133 = vsel %vm86, %v37, 0
  %v136 = vsel %vm86, %v38, 0
  %v139 = vsel %vm86, %v39, 0
  %v142 = vsel %vm86, %v40, 0
  %v145 = vsel %vm86, %v41, 0
  %v148 = vsel %vm86, %v42, 0
  %v151 = vsel %vm86, %v43, 0
  %v154 = vsel %vm86, %v44, 0
  %v157 = vsel %vm86, %v45, 0
  %v160 = vsel %vm86, %v46, 0
  %v163 = vsel %vm86, %v47, 0
  %v166 = vsel %vm86, %v48, 0
  %v169 = vsel %vm86, %v49, 0
  %v172 = vsel %vm86, %v50, 0
  %v175 = vsel %vm86, %v51, 0
  %v178 = vsel %vm86, %v52, 0
  %v181 = vsel %vm86, %v53, 0
  %v184 = vsel %vm86, %v54, 0
  %v187 = vsel %vm86, %v55, 0
  %v190 = vsel %vm86, %v56, 0
  %v193 = vsel %vm86, %v57, 0
  %195 = vmatpush.xpose.msra.mxu0 %v145
  %196 = vmatpush.xpose.msra.mxu0 %v142
  %197 = vmatpush.xpose.msra.mxu0 %v139
  %198 = vmatpush.xpose.msra.mxu0 %v136
  %199 = vmatpush.xpose.msra.mxu0 %v133
  %200 = vmatpush.xpose.msra.mxu0 %v130
  %201 = vmatpush.xpose.msra.mxu0 %v127
  %202 = vmatpush.xpose.msra.mxu0 %v124
  %203 = vmatpush.xpose.msra.mxu0 %v121
  %204 = vmatpush.xpose.msra.mxu0 %v118
  %205 = vmatpush.xpose.msra.mxu0 %v115
  %206 = vmatpush.xpose.msra.mxu0 %v112
  %207 = vmatpush.xpose.msra.mxu0 %v109
  %208 = vmatpush.xpose.msra.mxu0 %v106
  %209 = vmatpush.xpose.msra.mxu0 %v103
  %210 = vmatpush.xpose.msra.mxu0 %v100
  %211 = vmatmul.f32.gmra.mxu0 %v88
  %v212 = vpop.f32.mrf.mxu0
  %v213 = vadd.f32 %v69, %v212
  %214 = vmatmul.f32.gmra.mxu0 %v91
  %v215 = vpop.f32.mrf.mxu0
  %v216 = vadd.f32 %v74, %v215
  %217 = vmatmul.f32.gmra.mxu0 %v94
  %v218 = vpop.f32.mrf.mxu0
  %v219 = vadd.f32 %v79, %v218
  %220 = vmatmul.f32.gmra.mxu0 %v97
  %v221 = vpop.f32.mrf.mxu0
  %v222 = vadd.f32 %v84, %v221
  %223 = vdwg.mxu0
  %224 = vmatpush.xpose.msra.mxu0 %v193
  %225 = vmatpush.xpose.msra.mxu0 %v190
  %226 = vmatpush.xpose.msra.mxu0 %v187
  %227 = vmatpush.xpose.msra.mxu0 %v184
  %228 = vmatpush.xpose.msra.mxu0 %v181
  %229 = vmatpush.xpose.msra.mxu0 %v178
  %230 = vmatpush.xpose.msra.mxu0 %v175
  %231 = vmatpush.xpose.msra.mxu0 %v172
  %232 = vmatpush.xpose.msra.mxu0 %v169
  %233 = vmatpush.xpose.msra.mxu0 %v166
  %234 = vmatpush.xpose.msra.mxu0 %v163
  %235 = vmatpush.xpose.msra.mxu0 %v160
  %236 = vmatpush.xpose.msra.mxu0 %v157
  %237 = vmatpush.xpose.msra.mxu0 %v154
  %238 = vmatpush.xpose.msra.mxu0 %v151
  %239 = vmatpush.xpose.msra.mxu0 %v148
  %240 = vmatmul.f32.gmra.mxu0 %v88
  %v241 = vpop.f32.mrf.mxu0
  %v242 = vadd.f32 %v69, %v241
  %243 = vmatmul.f32.gmra.mxu0 %v91
  %v244 = vpop.f32.mrf.mxu0
  %v245 = vadd.f32 %v74, %v244
  %246 = vmatmul.f32.gmra.mxu0 %v94
  %v247 = vpop.f32.mrf.mxu0
  %v248 = vadd.f32 %v79, %v247
  %249 = vmatmul.f32.gmra.mxu0 %v97
  %v250 = vpop.f32.mrf.mxu0
  %v251 = vadd.f32 %v84, %v250
  %252 = vdwg.mxu0
  %vm253 = vcmp.gt.f32.partialorder %v213, 0.0
  %vm254 = vcmp.gt.f32.partialorder %v242, 0.0
  %vm255 = vcmp.gt.f32.partialorder %v216, 0.0
  %vm256 = vcmp.gt.f32.partialorder %v245, 0.0
  %vm257 = vcmp.gt.f32.partialorder %v219, 0.0
  %vm258 = vcmp.gt.f32.partialorder %v248, 0.0
  %vm259 = vcmp.gt.f32.partialorder %v222, 0.0
  %vm260 = vcmp.gt.f32.partialorder %v251, 0.0
  %v261 = vmin.f32 %v213, 0.0
  %v262 = vmin.f32 %v242, 0.0
  %v263 = vmin.f32 %v216, 0.0
  %v264 = vmin.f32 %v245, 0.0
  %v265 = vmin.f32 %v219, 0.0
  %v266 = vmin.f32 %v248, 0.0
  %v267 = vmin.f32 %v222, 0.0
  %v268 = vmin.f32 %v251, 0.0
  %v269 = vmul.f32 %v261, 1.442695
  %v270 = vpow.pop %v269
  %v271 = vmul.f32 %v262, 1.442695
  %v272 = vpow.pop %v271
  %v273 = vmul.f32 %v263, 1.442695
  %v274 = vpow.pop %v273
  %v275 = vmul.f32 %v264, 1.442695
  %v276 = vpow.pop %v275
  %v277 = vmul.f32 %v265, 1.442695
  %v278 = vpow.pop %v277
  %v279 = vmul.f32 %v266, 1.442695
  %v280 = vpow.pop %v279
  %v281 = vmul.f32 %v267, 1.442695
  %v282 = vpow.pop %v281
  %v283 = vmul.f32 %v268, 1.442695
  %v284 = vpow.pop %v283
  %v285 = vsub.f32 %v270, 1.0
  %v286 = vsub.f32 %v272, 1.0
  %v287 = vsub.f32 %v274, 1.0
  %v288 = vsub.f32 %v276, 1.0
  %v289 = vsub.f32 %v278, 1.0
  %v290 = vsub.f32 %v280, 1.0
  %v291 = vsub.f32 %v282, 1.0
  %v292 = vsub.f32 %v284, 1.0
  %v293 = vmul.f32 %v285, 0.2
  %v294 = vmul.f32 %v286, 0.2
  %v295 = vmul.f32 %v287, 0.2
  %v296 = vmul.f32 %v288, 0.2
  %v297 = vmul.f32 %v289, 0.2
  %v298 = vmul.f32 %v290, 0.2
  %v299 = vmul.f32 %v291, 0.2
  %v300 = vmul.f32 %v292, 0.2
  %v301 = vsel %vm253, %v213, %v293
  %v302 = vsel %vm254, %v242, %v294
  %v303 = vsel %vm255, %v216, %v295
  %v304 = vsel %vm256, %v245, %v296
  %v305 = vsel %vm257, %v219, %v297
  %v306 = vsel %vm258, %v248, %v298
  %v307 = vsel %vm259, %v222, %v299
  %v308 = vsel %vm260, %v251, %v300
  %v309 = vld [vmem:[%s3] sm:$0xff]
  %v310 = vld [vmem:[%s3 + $0x8] sm:$0xff]
  %v311 = vld [vmem:[%s3 + $0x10] sm:$0xff]
  %v312 = vld [vmem:[%s3 + $0x18] sm:$0xff]
  %v313 = vld [vmem:[%s4] sm:$0xff]
  %v314 = vld [vmem:[%s4 + $0x8] sm:$0xff]
  %v315 = vld [vmem:[%s4 + $0x10] sm:$0xff]
  %v316 = vld [vmem:[%s4 + $0x18] sm:$0xff]
  %318 = vset.pattern.permute.xlu0 0
  %319 = vperm.xlu0 %318, %v313
  %v320 = vpop.permute.xlu0 %319
  %323 = vset.pattern.permute.xlu0 0
  %324 = vperm.xlu0 %323, %v314
  %v325 = vpop.permute.xlu0 %324
  %328 = vset.pattern.permute.xlu0 0
  %329 = vperm.xlu0 %328, %v315
  %v330 = vpop.permute.xlu0 %329
  %333 = vset.pattern.permute.xlu0 0
  %334 = vperm.xlu0 %333, %v316
  %v335 = vpop.permute.xlu0 %334
  %vm337 = vcmask 261120
  %v339 = vsel %vm337, %v309, 0
  %v342 = vsel %vm337, %v310, 0
  %v345 = vsel %vm337, %v311, 0
  %v348 = vsel %vm337, %v312, 0
  %350 = vmatpush.msra.mxu0 0.0
  %351 = vmatpush.msra.mxu0 0.0
  %352 = vmatpush.msra.mxu0 0.0
  %353 = vmatpush.msra.mxu0 0.0
  %354 = vmatpush.msra.mxu0 0.0
  %355 = vmatpush.msra.mxu0 0.0
  %356 = vmatpush.msra.mxu0 0.0
  %357 = vmatpush.msra.mxu0 0.0
  %358 = vmatpush.msra.mxu0 0.0
  %359 = vmatpush.msra.mxu0 0.0
  %360 = vmatpush.msra.mxu0 0.0
  %361 = vmatpush.msra.mxu0 0.0
  %362 = vmatpush.msra.mxu0 %v307
  %363 = vmatpush.msra.mxu0 %v305
  %364 = vmatpush.msra.mxu0 %v303
  %365 = vmatpush.msra.mxu0 %v301
  %366 = vmatmul.f32.gmra.mxu0 %v339
  %v367 = vpop.f32.mrf.mxu0
  %v368 = vadd.f32 %v320, %v367
  %369 = vmatmul.f32.gmra.mxu0 %v342
  %v370 = vpop.f32.mrf.mxu0
  %v371 = vadd.f32 %v325, %v370
  %372 = vmatmul.f32.gmra.mxu0 %v345
  %v373 = vpop.f32.mrf.mxu0
  %v374 = vadd.f32 %v330, %v373
  %375 = vmatmul.f32.gmra.mxu0 %v348
  %v376 = vpop.f32.mrf.mxu0
  %v377 = vadd.f32 %v335, %v376
  %378 = vdwg.mxu0
  %379 = vmatpush.msra.mxu0 0.0
  %380 = vmatpush.msra.mxu0 0.0
  %381 = vmatpush.msra.mxu0 0.0
  %382 = vmatpush.msra.mxu0 0.0
  %383 = vmatpush.msra.mxu0 0.0
  %384 = vmatpush.msra.mxu0 0.0
  %385 = vmatpush.msra.mxu0 0.0
  %386 = vmatpush.msra.mxu0 0.0
  %387 = vmatpush.msra.mxu0 0.0
  %388 = vmatpush.msra.mxu0 0.0
  %389 = vmatpush.msra.mxu0 0.0
  %390 = vmatpush.msra.mxu0 0.0
  %391 = vmatpush.msra.mxu0 %v308
  %392 = vmatpush.msra.mxu0 %v306
  %393 = vmatpush.msra.mxu0 %v304
  %394 = vmatpush.msra.mxu0 %v302
  %395 = vmatmul.f32.gmra.mxu0 %v339
  %v396 = vpop.f32.mrf.mxu0
  %v397 = vadd.f32 %v320, %v396
  %398 = vmatmul.f32.gmra.mxu0 %v342
  %v399 = vpop.f32.mrf.mxu0
  %v400 = vadd.f32 %v325, %v399
  %401 = vmatmul.f32.gmra.mxu0 %v345
  %v402 = vpop.f32.mrf.mxu0
  %v403 = vadd.f32 %v330, %v402
  %404 = vmatmul.f32.gmra.mxu0 %v348
  %v405 = vpop.f32.mrf.mxu0
  %v406 = vadd.f32 %v335, %v405
  %407 = vdwg.mxu0
  %vm408 = vcmp.gt.f32.partialorder %v368, 0.0
  %vm409 = vcmp.gt.f32.partialorder %v397, 0.0
  %vm410 = vcmp.gt.f32.partialorder %v371, 0.0
  %vm411 = vcmp.gt.f32.partialorder %v400, 0.0
  %vm412 = vcmp.gt.f32.partialorder %v374, 0.0
  %vm413 = vcmp.gt.f32.partialorder %v403, 0.0
  %vm414 = vcmp.gt.f32.partialorder %v377, 0.0
  %vm415 = vcmp.gt.f32.partialorder %v406, 0.0
  %v416 = vmin.f32 %v368, 0.0
  %v417 = vmin.f32 %v397, 0.0
  %v418 = vmin.f32 %v371, 0.0
  %v419 = vmin.f32 %v400, 0.0
  %v420 = vmin.f32 %v374, 0.0
  %v421 = vmin.f32 %v403, 0.0
  %v422 = vmin.f32 %v377, 0.0
  %v423 = vmin.f32 %v406, 0.0
  %v424 = vmul.f32 %v416, 1.442695
  %v425 = vpow.pop %v424
  %v426 = vmul.f32 %v417, 1.442695
  %v427 = vpow.pop %v426
  %v428 = vmul.f32 %v418, 1.442695
  %v429 = vpow.pop %v428
  %v430 = vmul.f32 %v419, 1.442695
  %v431 = vpow.pop %v430
  %v432 = vmul.f32 %v420, 1.442695
  %v433 = vpow.pop %v432
  %v434 = vmul.f32 %v421, 1.442695
  %v435 = vpow.pop %v434
  %v436 = vmul.f32 %v422, 1.442695
  %v437 = vpow.pop %v436
  %v438 = vmul.f32 %v423, 1.442695
  %v439 = vpow.pop %v438
  %v440 = vsub.f32 %v425, 1.0
  %v441 = vsub.f32 %v427, 1.0
  %v442 = vsub.f32 %v429, 1.0
  %v443 = vsub.f32 %v431, 1.0
  %v444 = vsub.f32 %v433, 1.0
  %v445 = vsub.f32 %v435, 1.0
  %v446 = vsub.f32 %v437, 1.0
  %v447 = vsub.f32 %v439, 1.0
  %v448 = vmul.f32 %v440, 0.2
  %v449 = vmul.f32 %v441, 0.2
  %v450 = vmul.f32 %v442, 0.2
  %v451 = vmul.f32 %v443, 0.2
  %v452 = vmul.f32 %v444, 0.2
  %v453 = vmul.f32 %v445, 0.2
  %v454 = vmul.f32 %v446, 0.2
  %v455 = vmul.f32 %v447, 0.2
  %v456 = vsel %vm408, %v368, %v448
  %v457 = vsel %vm409, %v397, %v449
  %v458 = vsel %vm410, %v371, %v450
  %v459 = vsel %vm411, %v400, %v451
  %v460 = vsel %vm412, %v374, %v452
  %v461 = vsel %vm413, %v403, %v453
  %v462 = vsel %vm414, %v377, %v454
  %v463 = vsel %vm415, %v406, %v455
  %v464 = vld [vmem:[%s5] sm:$0x3]
  %v465 = vld [vmem:[%s6] sm:$0x3]
  %467 = vset.pattern.permute.xlu0 0
  %468 = vperm.xlu0 %467, %v465
  %v469 = vpop.permute.xlu0 %468
  %v472 = vsel %vm337, %v464, 0
  %474 = vmatpush.msra.mxu0 0.0
  %475 = vmatpush.msra.mxu0 0.0
  %476 = vmatpush.msra.mxu0 0.0
  %477 = vmatpush.msra.mxu0 0.0
  %478 = vmatpush.msra.mxu0 0.0
  %479 = vmatpush.msra.mxu0 0.0
  %480 = vmatpush.msra.mxu0 0.0
  %481 = vmatpush.msra.mxu0 0.0
  %482 = vmatpush.msra.mxu0 0.0
  %483 = vmatpush.msra.mxu0 0.0
  %484 = vmatpush.msra.mxu0 0.0
  %485 = vmatpush.msra.mxu0 0.0
  %486 = vmatpush.msra.mxu0 %v462
  %487 = vmatpush.msra.mxu0 %v460
  %488 = vmatpush.msra.mxu0 %v458
  %489 = vmatpush.msra.mxu0 %v456
  %490 = vmatmul.f32.gmra.mxu0 %v472
  %v491 = vpop.f32.mrf.mxu0
  %v492 = vadd.f32 %v469, %v491
  %493 = vdwg.mxu0
  %494 = vmatpush.msra.mxu0 0.0
  %495 = vmatpush.msra.mxu0 0.0
  %496 = vmatpush.msra.mxu0 0.0
  %497 = vmatpush.msra.mxu0 0.0
  %498 = vmatpush.msra.mxu0 0.0
  %499 = vmatpush.msra.mxu0 0.0
  %500 = vmatpush.msra.mxu0 0.0
  %501 = vmatpush.msra.mxu0 0.0
  %502 = vmatpush.msra.mxu0 0.0
  %503 = vmatpush.msra.mxu0 0.0
  %504 = vmatpush.msra.mxu0 0.0
  %505 = vmatpush.msra.mxu0 0.0
  %506 = vmatpush.msra.mxu0 %v463
  %507 = vmatpush.msra.mxu0 %v461
  %508 = vmatpush.msra.mxu0 %v459
  %509 = vmatpush.msra.mxu0 %v457
  %510 = vmatmul.f32.gmra.mxu0 %v472
  %v511 = vpop.f32.mrf.mxu0
  %v512 = vadd.f32 %v469, %v511
  %513 = vdwg.mxu0
  %514 = vxpose.xlu0.b32.start [1/16] %v492, 128
  %515 = vxpose.xlu0.b32.cont [2/16] 0.0, 128
  %516 = vxpose.xlu0.b32.cont [3/16] 0.0, 128
  %517 = vxpose.xlu0.b32.cont [4/16] 0.0, 128
  %518 = vxpose.xlu0.b32.cont [5/16] 0.0, 128
  %519 = vxpose.xlu0.b32.cont [6/16] 0.0, 128
  %520 = vxpose.xlu0.b32.cont [7/16] 0.0, 128
  %521 = vxpose.xlu0.b32.cont [8/16] 0.0, 128
  %522 = vxpose.xlu0.b32.cont [9/16] 0.0, 128
  %523 = vxpose.xlu0.b32.cont [10/16] 0.0, 128
  %524 = vxpose.xlu0.b32.cont [11/16] 0.0, 128
  %525 = vxpose.xlu0.b32.cont [12/16] 0.0, 128
  %526 = vxpose.xlu0.b32.cont [13/16] 0.0, 128
  %527 = vxpose.xlu0.b32.cont [14/16] 0.0, 128
  %528 = vxpose.xlu0.b32.cont [15/16] 0.0, 128
  %529 = vxpose.xlu0.b32.end [16/16] 0.0, 128
  %v530 = vpop.trf.xlu0
  %v531 = vpop.trf.xlu0
  %v532 = vpop.trf.xlu0
  %v533 = vpop.trf.xlu0
  %v534 = vpop.trf.xlu0
  %v535 = vpop.trf.xlu0
  %v536 = vpop.trf.xlu0
  %v537 = vpop.trf.xlu0
  %v538 = vpop.trf.xlu0
  %v539 = vpop.trf.xlu0
  %v540 = vpop.trf.xlu0
  %v541 = vpop.trf.xlu0
  %v542 = vpop.trf.xlu0
  %v543 = vpop.trf.xlu0
  %v544 = vpop.trf.xlu0
  %v545 = vpop.trf.xlu0
  %546 = vxpose.xlu0.b32.start [1/16] %v512, 128
  %547 = vxpose.xlu0.b32.cont [2/16] 0.0, 128
  %548 = vxpose.xlu0.b32.cont [3/16] 0.0, 128
  %549 = vxpose.xlu0.b32.cont [4/16] 0.0, 128
  %550 = vxpose.xlu0.b32.cont [5/16] 0.0, 128
  %551 = vxpose.xlu0.b32.cont [6/16] 0.0, 128
  %552 = vxpose.xlu0.b32.cont [7/16] 0.0, 128
  %553 = vxpose.xlu0.b32.cont [8/16] 0.0, 128
  %554 = vxpose.xlu0.b32.cont [9/16] 0.0, 128
  %555 = vxpose.xlu0.b32.cont [10/16] 0.0, 128
  %556 = vxpose.xlu0.b32.cont [11/16] 0.0, 128
  %557 = vxpose.xlu0.b32.cont [12/16] 0.0, 128
  %558 = vxpose.xlu0.b32.cont [13/16] 0.0, 128
  %559 = vxpose.xlu0.b32.cont [14/16] 0.0, 128
  %560 = vxpose.xlu0.b32.cont [15/16] 0.0, 128
  %561 = vxpose.xlu0.b32.end [16/16] 0.0, 128
  %v562 = vpop.trf.xlu0
  %v563 = vpop.trf.xlu0
  %v564 = vpop.trf.xlu0
  %v565 = vpop.trf.xlu0
  %v566 = vpop.trf.xlu0
  %v567 = vpop.trf.xlu0
  %v568 = vpop.trf.xlu0
  %v569 = vpop.trf.xlu0
  %v570 = vpop.trf.xlu0
  %v571 = vpop.trf.xlu0
  %v572 = vpop.trf.xlu0
  %v573 = vpop.trf.xlu0
  %v574 = vpop.trf.xlu0
  %v575 = vpop.trf.xlu0
  %v576 = vpop.trf.xlu0
  %v577 = vpop.trf.xlu0
  %vm578 = vcmask 15360
  %579 = vst.msk [vmem:[%s7] sm:$0xff] %vm578, %v530
  %580 = vst.msk [vmem:[%s7 + $0x8] sm:$0xff] %vm578, %v531
  %581 = vst.msk [vmem:[%s7 + $0x10] sm:$0xff] %vm578, %v532
  %582 = vst.msk [vmem:[%s7 + $0x18] sm:$0xff] %vm578, %v533
  %583 = vst.msk [vmem:[%s7 + $0x20] sm:$0xff] %vm578, %v534
  %584 = vst.msk [vmem:[%s7 + $0x28] sm:$0xff] %vm578, %v535
  %585 = vst.msk [vmem:[%s7 + $0x30] sm:$0xff] %vm578, %v536
  %586 = vst.msk [vmem:[%s7 + $0x38] sm:$0xff] %vm578, %v537
  %587 = vst.msk [vmem:[%s7 + $0x40] sm:$0xff] %vm578, %v538
  %588 = vst.msk [vmem:[%s7 + $0x48] sm:$0xff] %vm578, %v539
  %589 = vst.msk [vmem:[%s7 + $0x50] sm:$0xff] %vm578, %v540
  %590 = vst.msk [vmem:[%s7 + $0x58] sm:$0xff] %vm578, %v541
  %591 = vst.msk [vmem:[%s7 + $0x60] sm:$0xff] %vm578, %v542
  %592 = vst.msk [vmem:[%s7 + $0x68] sm:$0xff] %vm578, %v543
  %593 = vst.msk [vmem:[%s7 + $0x70] sm:$0xff] %vm578, %v544
  %594 = vst.msk [vmem:[%s7 + $0x78] sm:$0xff] %vm578, %v545
  %595 = vst.msk [vmem:[%s7 + $0x80] sm:$0xff] %vm578, %v562
  %596 = vst.msk [vmem:[%s7 + $0x88] sm:$0xff] %vm578, %v563
  %597 = vst.msk [vmem:[%s7 + $0x90] sm:$0xff] %vm578, %v564
  %598 = vst.msk [vmem:[%s7 + $0x98] sm:$0xff] %vm578, %v565
  %599 = vst.msk [vmem:[%s7 + $0xa0] sm:$0xff] %vm578, %v566
  %600 = vst.msk [vmem:[%s7 + $0xa8] sm:$0xff] %vm578, %v567
  %601 = vst.msk [vmem:[%s7 + $0xb0] sm:$0xff] %vm578, %v568
  %602 = vst.msk [vmem:[%s7 + $0xb8] sm:$0xff] %vm578, %v569
  %603 = vst.msk [vmem:[%s7 + $0xc0] sm:$0xff] %vm578, %v570
  %604 = vst.msk [vmem:[%s7 + $0xc8] sm:$0xff] %vm578, %v571
  %605 = vst.msk [vmem:[%s7 + $0xd0] sm:$0xff] %vm578, %v572
  %606 = vst.msk [vmem:[%s7 + $0xd8] sm:$0xff] %vm578, %v573
  %607 = vst.msk [vmem:[%s7 + $0xe0] sm:$0xff] %vm578, %v574
  %608 = vst.msk [vmem:[%s7 + $0xe8] sm:$0xff] %vm578, %v575
  %609 = vst.msk [vmem:[%s7 + $0xf0] sm:$0xff] %vm578, %v576
  %610 = vst.msk [vmem:[%s7 + $0xf8] sm:$0xff] %vm578, %v577
  // Predicated region
  $region30: #{tpu_custom_call.1} parent=0 // pred_check
    _
  $region31: #{tpu_custom_call.1} parent=0 // pred_check_branch
    %612 = sbr.rel (0) target = $region33
  $region32: #{tpu_custom_call.1} parent=0 // pred_region
    _
  $region33: #{tpu_custom_call.1} parent=0 // pred_fallthru
    _
  // Predicated region
  $region34: #{tpu_custom_call.1} parent=0 // pred_check
    _
  $region35: #{tpu_custom_call.1} parent=0 // pred_check_branch
    %614 = sbr.rel (0) target = $region37
  $region36: #{tpu_custom_call.1} parent=0 // pred_region
    _
  $region37: #{tpu_custom_call.1} parent=0 // pred_fallthru
    _

</llo_original>
